<compile_context>
chip_gen: v5e
topology: v5e:2x2
jax: 0.10.0
libtpu: 0.0.40
codegen_flags: <defaults>
</compile_context>

<pallas_src>
import functools

import jax
import jax.numpy as jnp
import numpy as np
from jax import lax
from jax.experimental import pallas as pl
from jax.experimental.pallas import tpu as pltpu


# --------------------------------------------------------------------------
# Fused kernel: FPS -> kNN -> gather -> center-subtract (one batch item / step)
# --------------------------------------------------------------------------
def _group_kernel(packed_ref,
                  idxnew_ref, center_ref, ncenter_ref,
                  neigh_ref, gnorm_ref, idx_ref):
    # packed_ref : (1, 8, N) f32   rows = [x, y, z, nx, ny, nz, iota(point idx), 0]
    # idxnew_ref : (1, 1, G) i32
    # center_ref : (1, 3, G) f32
    # ncenter_ref: (1, 3, G) f32
    # neigh_ref  : (1, K, 3, G) f32   (wrapper -> [B, G, K, 3])
    # gnorm_ref  : (1, K, 3, G) f32
    # idx_ref    : (1, K, 1, G) i32   (wrapper -> [B, G, K])
    n = packed_ref.shape[2]
    g_total = center_ref.shape[2]
    k_total = neigh_ref.shape[1]

    packed = packed_ref[0]                       # [8, N]  channel-first, N on lanes
    xyz3 = packed[0:3, :]                        # [3, N]
    x0, x1, x2 = packed[0:1, :], packed[1:2, :], packed[2:3, :]

    iota_n = lax.broadcasted_iota(jnp.int32, (1, n), 1)          # [1, N]
    row_g = lax.broadcasted_iota(jnp.int32, (g_total, 1), 0)     # [G, 1]
    iota_gn = lax.broadcasted_iota(jnp.int32, (g_total, n), 1)   # [G, N]

    # ----------------- farthest point sampling (sequential over G) ----------
    # Per-step work kept minimal: one masked lane-reduce gather of the new
    # centroid xyz, VPU distance update, min/max reduces.  Norm gathers and
    # center assembly are hoisted out of the loop (single matmul afterwards).
    def fps_body(gi, carry):
        dist, farthest, idx_col = carry
        idx_col = jnp.where(row_g == gi, farthest, idx_col)             # [G, 1]
        selb = iota_n == farthest                                        # [1, N]
        cvec = jnp.sum(jnp.where(selb, xyz3, 0.0), axis=1, keepdims=True)  # [3,1]
        dx = x0 - cvec[0:1]
        dy = x1 - cvec[1:2]
        dz = x2 - cvec[2:3]
        dist = jnp.minimum(dist, dx * dx + dy * dy + dz * dz)           # [1, N]
        maxval = jnp.max(dist)
        # first-index tie-break (argmax kept off: max/where/min lowers reliably)
        farthest = jnp.min(jnp.where(dist == maxval, iota_n, n)).astype(jnp.int32)
        return dist, farthest, idx_col

    fps_init = (jnp.full((1, n), 1e10, dtype=jnp.float32),
                jnp.zeros((), jnp.int32),
                jnp.zeros((g_total, 1), jnp.int32))
    _, _, idx_col = lax.fori_loop(0, g_total, fps_body, fps_init)

    # ----------------- centers via one exact one-hot MXU matmul -------------
    dn = (((1,), (1,)), ((), ()))        # contract the lane (N) axis of both
    sel = (iota_gn == idx_col).astype(jnp.float32)                    # [G, N]
    c8 = lax.dot_general(packed, sel, dn, precision=lax.Precision.HIGHEST,
                         preferred_element_type=jnp.float32)          # [8, G]
    cg8 = lax.dot_general(sel, packed, dn, precision=lax.Precision.HIGHEST,
                          preferred_element_type=jnp.float32)         # [G, 8]
    center_cg = c8[0:3]                                               # [3, G]
    center_ref[0] = center_cg
    ncenter_ref[0] = c8[3:6]
    idxnew_ref[0] = (c8[6:7] + 0.5).astype(jnp.int32)                 # [1, G]

    # ----------------- kNN distances [G, N] (exact difference form) ---------
    cgx, cgy, cgz = cg8[:, 0:1], cg8[:, 1:2], cg8[:, 2:3]             # [G, 1]
    d0 = ((x0 - cgx) * (x0 - cgx)
          + (x1 - cgy) * (x1 - cgy)
          + (x2 - cgz) * (x2 - cgz))                                  # [G, N]

    # ----------------- kNN loop: argmin + one one-hot MXU gather per k ------
    def knn_body(ki, d):
        minv = jnp.min(d, axis=1, keepdims=True)                      # [G, 1]
        idx_k = jnp.min(jnp.where(d == minv, iota_gn, n),
                        axis=1, keepdims=True)                        # [G, 1]
        hit = iota_gn == idx_k                                        # [G, N]
        hitf = hit.astype(jnp.float32)
        # exact one-hot gather on the otherwise-idle MXU (off the argmin chain)
        g8 = lax.dot_general(packed, hitf, dn,
                             precision=lax.Precision.HIGHEST,
                             preferred_element_type=jnp.float32)      # [8, G]
        neigh_ref[0, ki] = g8[0:3] - center_cg                        # (3, G)
        gnorm_ref[0, ki] = g8[3:6]                                    # (3, G)
        idx_ref[0, ki] = (g8[6:7] + 0.5).astype(jnp.int32)            # (1, G)
        return jnp.where(hit, jnp.float32(jnp.inf), d)                # exclude chosen

    lax.fori_loop(0, k_total, knn_body, d0)


# --------------------------------------------------------------------------
# Wrapper (the Group.forward equivalent)
# --------------------------------------------------------------------------
@functools.partial(jax.jit, static_argnums=(2, 3))
def group_forward(xyz, norm, num_group, group_size):
    """xyz, norm: [B, N, 3] float32.

    Returns (neighborhood, center, norm_group, norm_center, idx, idx_new),
    matching the PyTorch Group.forward tuple (indices are int32)."""
    B, N, _ = xyz.shape
    G, K = num_group, group_size
    xyz = xyz.astype(jnp.float32)
    norm = norm.astype(jnp.float32)

    # Channel-first, lane-dense packed input: rows [x, y, z, nx, ny, nz, iota, 0].
    xyz_cf = jnp.transpose(xyz, (0, 2, 1))                            # [B, 3, N]
    nrm_cf = jnp.transpose(norm, (0, 2, 1))                           # [B, 3, N]
    iota_row = jnp.broadcast_to(
        jnp.arange(N, dtype=jnp.float32)[None, None, :], (B, 1, N))
    zero_row = jnp.zeros((B, 1, N), jnp.float32)
    packed = jnp.concatenate([xyz_cf, nrm_cf, iota_row, zero_row], axis=1)  # [B,8,N]

    out_shapes = (
        jax.ShapeDtypeStruct((B, 1, G), jnp.int32),        # idx_new  (G on lanes)
        jax.ShapeDtypeStruct((B, 3, G), jnp.float32),      # center   (channel-first)
        jax.ShapeDtypeStruct((B, 3, G), jnp.float32),      # norm_center
        jax.ShapeDtypeStruct((B, K, 3, G), jnp.float32),   # neighborhood
        jax.ShapeDtypeStruct((B, K, 3, G), jnp.float32),   # norm_group
        jax.ShapeDtypeStruct((B, K, 1, G), jnp.int32),     # knn idx
    )
    out_specs = (
        pl.BlockSpec((1, 1, G), lambda b: (b, 0, 0)),
        pl.BlockSpec((1, 3, G), lambda b: (b, 0, 0)),
        pl.BlockSpec((1, 3, G), lambda b: (b, 0, 0)),
        pl.BlockSpec((1, K, 3, G), lambda b: (b, 0, 0, 0)),
        pl.BlockSpec((1, K, 3, G), lambda b: (b, 0, 0, 0)),
        pl.BlockSpec((1, K, 1, G), lambda b: (b, 0, 0, 0)),
    )

    fused = pl.pallas_call(
        _group_kernel,
        out_shape=out_shapes,
        grid=(B,),
        in_specs=[pl.BlockSpec((1, 8, N), lambda b: (b, 0, 0))],
        out_specs=out_specs,
        compiler_params=pltpu.CompilerParams(
            dimension_semantics=("parallel",)),   # B >= 2 -> both TCs on v7x
    )
    idxnew_r, center_r, ncenter_r, neigh_r, gnorm_r, idx_r = fused(packed)

    # Cheap layout plumbing back to the torch output layouts.
    idx_new = idxnew_r[:, 0, :]                                    # [B, G]
    center = jnp.transpose(center_r, (0, 2, 1))                    # [B, G, 3]
    norm_center = jnp.transpose(ncenter_r, (0, 2, 1))              # [B, G, 3]
    neighborhood = jnp.transpose(neigh_r, (0, 3, 1, 2))            # [B, G, K, 3]
    norm_group = jnp.transpose(gnorm_r, (0, 3, 1, 2))              # [B, G, K, 3]
    idx = jnp.transpose(idx_r[:, :, 0, :], (0, 2, 1))              # [B, G, K]
    return neighborhood, center, norm_group, norm_center, idx, idx_new


# --------------------------------------------------------------------------
if __name__ == "__main__":
    key = jax.random.PRNGKey(0)
    B, N = 2, 64
    num_group, group_size = 8, 8

    k1, k2 = jax.random.split(key)
    xyz = jax.random.uniform(k1, (B, N, 3), dtype=jnp.float32)
    norm = jax.random.normal(k2, (B, N, 3), dtype=jnp.float32)
    norm = norm / jnp.linalg.norm(norm, axis=-1, keepdims=True)

    out = group_forward(xyz, norm, num_group, group_size)
    out = jax.block_until_ready(out)
    neighborhood, center, norm_group, norm_center, idx, idx_new = out

    # shape checks
    assert neighborhood.shape == (B, num_group, group_size, 3)
    assert center.shape == (B, num_group, 3)
    assert norm_group.shape == (B, num_group, group_size, 3)
    assert norm_center.shape == (B, num_group, 3)
    assert idx.shape == (B, num_group, group_size)
    assert idx_new.shape == (B, num_group)

    # consistency checks against plain-JAX gathers of the kernel-produced indices
    gath_center = jnp.take_along_axis(xyz, idx_new[:, :, None], axis=1)   # [B,G,3]
    np.testing.assert_allclose(np.asarray(center), np.asarray(gath_center),
                               rtol=1e-5, atol=1e-5)
    gath_ncenter = jnp.take_along_axis(norm, idx_new[:, :, None], axis=1)
    np.testing.assert_allclose(np.asarray(norm_center), np.asarray(gath_ncenter),
                               rtol=1e-5, atol=1e-5)
    idx_flat = idx.reshape(B, num_group * group_size)
    gath_pts = jnp.take_along_axis(xyz, idx_flat[:, :, None], axis=1)
    gath_pts = gath_pts.reshape(B, num_group, group_size, 3)
    np.testing.assert_allclose(
        np.asarray(neighborhood + center[:, :, None, :]), np.asarray(gath_pts),
        rtol=1e-5, atol=1e-5)
    gath_nrm = jnp.take_along_axis(norm, idx_flat[:, :, None], axis=1)
    gath_nrm = gath_nrm.reshape(B, num_group, group_size, 3)
    np.testing.assert_allclose(np.asarray(norm_group), np.asarray(gath_nrm),
                               rtol=1e-5, atol=1e-5)

    # nearest neighbor of each centroid must be the centroid itself (distance 0)
    np.testing.assert_array_equal(np.asarray(idx[:, :, 0]), np.asarray(idx_new))

    print("KERNEL_OK")
</pallas_src>

<mosaic_0001>
module attributes {stable_mosaic.version = 11 : i64} {
  func.func @_group_kernel(%arg0: i32, %arg1: memref<1x8x64xf32, #tpu.memory_space<vmem>>, %arg2: memref<1x1x8xi32, #tpu.memory_space<vmem>>, %arg3: memref<1x3x8xf32, #tpu.memory_space<vmem>>, %arg4: memref<1x3x8xf32, #tpu.memory_space<vmem>>, %arg5: memref<1x8x3x8xf32, #tpu.memory_space<vmem>>, %arg6: memref<1x8x3x8xf32, #tpu.memory_space<vmem>>, %arg7: memref<1x8x1x8xi32, #tpu.memory_space<vmem>>) attributes {dimension_semantics = [#tpu.dimension_semantics<parallel>], iteration_bounds = array<i64: 2>, scalar_prefetch = 0 : i64, scratch_operands = 0 : i64, tpu.core_type = #tpu.core_type<tc>, window_params = [{transform_indices = @transform_0, window_bounds = array<i64: 1, 8, 64>}, {transform_indices = @transform_1, window_bounds = array<i64: 1, 1, 8>}, {transform_indices = @transform_2, window_bounds = array<i64: 1, 3, 8>}, {transform_indices = @transform_3, window_bounds = array<i64: 1, 3, 8>}, {transform_indices = @transform_4, window_bounds = array<i64: 1, 8, 3, 8>}, {transform_indices = @transform_5, window_bounds = array<i64: 1, 8, 3, 8>}, {transform_indices = @transform_6, window_bounds = array<i64: 1, 8, 1, 8>}]} {
    %c0 = arith.constant 0 : index
    %c0_0 = arith.constant 0 : index
    %c0_1 = arith.constant 0 : index
    %0 = vector.load %arg1[%c0, %c0_0, %c0_1] : memref<1x8x64xf32, #tpu.memory_space<vmem>>, vector<1x8x64xf32>
    %1 = vector.shape_cast %0 : vector<1x8x64xf32> to vector<8x64xf32>
    %2 = vector.extract_strided_slice %1 {offsets = [0, 0], sizes = [3, 64], strides = [1, 1]} : vector<8x64xf32> to vector<3x64xf32>
    %3 = vector.extract_strided_slice %1 {offsets = [0, 0], sizes = [1, 64], strides = [1, 1]} : vector<8x64xf32> to vector<1x64xf32>
    %4 = vector.extract_strided_slice %1 {offsets = [1, 0], sizes = [1, 64], strides = [1, 1]} : vector<8x64xf32> to vector<1x64xf32>
    %5 = vector.extract_strided_slice %1 {offsets = [2, 0], sizes = [1, 64], strides = [1, 1]} : vector<8x64xf32> to vector<1x64xf32>
    %6 = tpu.iota {dimensions = array<i32: 1>} : vector<1x64xi32>
    %7 = tpu.iota {dimensions = array<i32: 0>} : vector<8x1xi32>
    %8 = tpu.iota {dimensions = array<i32: 1>} : vector<8x64xi32>
    %cst = arith.constant 1.000000e+10 : f32
    %9 = vector.broadcast %cst : f32 to vector<1x64xf32>
    %c0_i32 = arith.constant 0 : i32
    %10 = vector.broadcast %c0_i32 : i32 to vector<8x1xi32>
    %c0_i32_2 = arith.constant 0 : i32
    %c0_i32_3 = arith.constant 0 : i32
    %c8_i32 = arith.constant 8 : i32
    %11 = arith.addi %c0_i32_3, %c8_i32 : i32
    %c1_i32 = arith.constant 1 : i32
    %12:3 = scf.for %arg8 = %c0_i32_3 to %11 step %c1_i32 iter_args(%arg9 = %9, %arg10 = %c0_i32_2, %arg11 = %10) -> (vector<1x64xf32>, i32, vector<8x1xi32>)  : i32 {
      %62 = vector.broadcast %arg8 : i32 to vector<8x1xi32>
      %63 = arith.cmpi eq, %7, %62 : vector<8x1xi32>
      %64 = vector.broadcast %arg10 : i32 to vector<8x1xi32>
      %65 = arith.select %63, %64, %arg11 : vector<8x1xi1>, vector<8x1xi32>
      %66 = vector.broadcast %arg10 : i32 to vector<1x64xi32>
      %67 = arith.cmpi eq, %6, %66 : vector<1x64xi32>
      %cst_21 = arith.constant 0.000000e+00 : f32
      %68 = vector.shape_cast %67 : vector<1x64xi1> to vector<1x64xi1>
      %69 = vector.broadcast %68 : vector<1x64xi1> to vector<3x64xi1>
      %70 = vector.broadcast %cst_21 : f32 to vector<3x64xf32>
      %71 = arith.select %69, %2, %70 : vector<3x64xi1>, vector<3x64xf32>
      %cst_22 = arith.constant dense<0.000000e+00> : vector<3xf32>
      %72 = vector.multi_reduction <add>, %71, %cst_22 [1] : vector<3x64xf32> to vector<3xf32>
      %73 = vector.shape_cast %72 : vector<3xf32> to vector<3x1xf32>
      %74 = vector.extract_strided_slice %73 {offsets = [0, 0], sizes = [1, 1], strides = [1, 1]} : vector<3x1xf32> to vector<1x1xf32>
      %75 = vector.broadcast %74 : vector<1x1xf32> to vector<1x64xf32>
      %76 = arith.subf %3, %75 : vector<1x64xf32>
      %77 = vector.extract_strided_slice %73 {offsets = [1, 0], sizes = [1, 1], strides = [1, 1]} : vector<3x1xf32> to vector<1x1xf32>
      %78 = vector.broadcast %77 : vector<1x1xf32> to vector<1x64xf32>
      %79 = arith.subf %4, %78 : vector<1x64xf32>
      %80 = vector.extract_strided_slice %73 {offsets = [2, 0], sizes = [1, 1], strides = [1, 1]} : vector<3x1xf32> to vector<1x1xf32>
      %81 = vector.broadcast %80 : vector<1x1xf32> to vector<1x64xf32>
      %82 = arith.subf %5, %81 : vector<1x64xf32>
      %83 = arith.mulf %76, %76 : vector<1x64xf32>
      %84 = arith.mulf %79, %79 : vector<1x64xf32>
      %85 = arith.addf %83, %84 : vector<1x64xf32>
      %86 = arith.mulf %82, %82 : vector<1x64xf32>
      %87 = arith.addf %85, %86 : vector<1x64xf32>
      %88 = arith.minimumf %arg9, %87 : vector<1x64xf32>
      %89 = vector.shape_cast %88 : vector<1x64xf32> to vector<1x1x64xf32>
      %cst_23 = arith.constant dense<0xFF800000> : vector<1xf32>
      %90 = vector.multi_reduction <maximumf>, %89, %cst_23 [1, 2] : vector<1x1x64xf32> to vector<1xf32>
      %91 = vector.shape_cast %90 : vector<1xf32> to vector<1x1x1xf32>
      %92 = vector.extract %91[0, 0, 0] : f32 from vector<1x1x1xf32>
      %93 = vector.broadcast %92 : f32 to vector<1x64xf32>
      %94 = arith.cmpf oeq, %88, %93 : vector<1x64xf32>
      %c64_i32 = arith.constant 64 : i32
      %95 = vector.broadcast %c64_i32 : i32 to vector<1x64xi32>
      %96 = arith.select %94, %6, %95 : vector<1x64xi1>, vector<1x64xi32>
      %97 = vector.shape_cast %96 : vector<1x64xi32> to vector<1x1x64xi32>
      %cst_24 = arith.constant dense<2147483647> : vector<1xi32>
      %98 = vector.multi_reduction <minsi>, %97, %cst_24 [1, 2] : vector<1x1x64xi32> to vector<1xi32>
      %99 = vector.shape_cast %98 : vector<1xi32> to vector<1x1x1xi32>
      %100 = vector.extract %99[0, 0, 0] : i32 from vector<1x1x1xi32>
      scf.yield %88, %100, %65 : vector<1x64xf32>, i32, vector<8x1xi32>
    }
    %c8_i32_4 = arith.constant 8 : i32
    %13 = vector.broadcast %12#2 : vector<8x1xi32> to vector<8x64xi32>
    %14 = arith.cmpi eq, %8, %13 : vector<8x64xi32>
    %15 = arith.extui %14 : vector<8x64xi1> to vector<8x64xi32>
    %16 = arith.sitofp %15 : vector<8x64xi32> to vector<8x64xf32>
    %cst_5 = arith.constant dense<0.000000e+00> : vector<8x8xf32>
    %17 = tpu.matmul %1, %16, %cst_5 {dimension_numbers = #tpu.dot_dimension_numbers<[1], [1], [0], [0], [0, 0, 1, 0], [], []>, precision = #tpu.contract_precision<fp32>} : vector<8x64xf32>, vector<8x64xf32>, vector<8x8xf32> -> vector<8x8xf32>
    %cst_6 = arith.constant dense<0.000000e+00> : vector<8x8xf32>
    %18 = tpu.matmul %16, %1, %cst_6 {dimension_numbers = #tpu.dot_dimension_numbers<[1], [1], [0], [0], [0, 0, 1, 0], [], []>, precision = #tpu.contract_precision<fp32>} : vector<8x64xf32>, vector<8x64xf32>, vector<8x8xf32> -> vector<8x8xf32>
    %19 = vector.extract_strided_slice %17 {offsets = [0, 0], sizes = [3, 8], strides = [1, 1]} : vector<8x8xf32> to vector<3x8xf32>
    %c0_7 = arith.constant 0 : index
    %c0_8 = arith.constant 0 : index
    %c0_9 = arith.constant 0 : index
    %20 = vector.load %arg3[%c0_7, %c0_8, %c0_9] : memref<1x3x8xf32, #tpu.memory_space<vmem>>, vector<1x3x8xf32>
    %21 = vector.shape_cast %20 : vector<1x3x8xf32> to vector<3x8xf32>
    %22 = vector.shape_cast %19 : vector<3x8xf32> to vector<1x3x8xf32>
    tpu.vector_store %arg3[%c0_7, %c0_8, %c0_9], %22 {strides = array<i32>} : memref<1x3x8xf32, #tpu.memory_space<vmem>>, vector<1x3x8xf32>,
    %23 = vector.extract_strided_slice %17 {offsets = [3, 0], sizes = [3, 8], strides = [1, 1]} : vector<8x8xf32> to vector<3x8xf32>
    %c0_10 = arith.constant 0 : index
    %c0_11 = arith.constant 0 : index
    %c0_12 = arith.constant 0 : index
    %24 = vector.load %arg4[%c0_10, %c0_11, %c0_12] : memref<1x3x8xf32, #tpu.memory_space<vmem>>, vector<1x3x8xf32>
    %25 = vector.shape_cast %24 : vector<1x3x8xf32> to vector<3x8xf32>
    %26 = vector.shape_cast %23 : vector<3x8xf32> to vector<1x3x8xf32>
    tpu.vector_store %arg4[%c0_10, %c0_11, %c0_12], %26 {strides = array<i32>} : memref<1x3x8xf32, #tpu.memory_space<vmem>>, vector<1x3x8xf32>,
    %27 = vector.extract_strided_slice %17 {offsets = [6, 0], sizes = [1, 8], strides = [1, 1]} : vector<8x8xf32> to vector<1x8xf32>
    %cst_13 = arith.constant 5.000000e-01 : f32
    %28 = vector.broadcast %cst_13 : f32 to vector<1x8xf32>
    %29 = arith.addf %27, %28 : vector<1x8xf32>
    %30 = arith.fptosi %29 : vector<1x8xf32> to vector<1x8xi32>
    %c0_14 = arith.constant 0 : index
    %c0_15 = arith.constant 0 : index
    %c0_16 = arith.constant 0 : index
    %31 = vector.load %arg2[%c0_14, %c0_15, %c0_16] : memref<1x1x8xi32, #tpu.memory_space<vmem>>, vector<1x1x8xi32>
    %32 = vector.shape_cast %31 : vector<1x1x8xi32> to vector<1x8xi32>
    %33 = vector.shape_cast %30 : vector<1x8xi32> to vector<1x1x8xi32>
    tpu.vector_store %arg2[%c0_14, %c0_15, %c0_16], %33 {strides = array<i32>} : memref<1x1x8xi32, #tpu.memory_space<vmem>>, vector<1x1x8xi32>,
    %34 = vector.extract_strided_slice %18 {offsets = [0, 0], sizes = [8, 1], strides = [1, 1]} : vector<8x8xf32> to vector<8x1xf32>
    %35 = vector.extract_strided_slice %18 {offsets = [0, 1], sizes = [8, 1], strides = [1, 1]} : vector<8x8xf32> to vector<8x1xf32>
    %36 = vector.extract_strided_slice %18 {offsets = [0, 2], sizes = [8, 1], strides = [1, 1]} : vector<8x8xf32> to vector<8x1xf32>
    %37 = vector.broadcast %3 : vector<1x64xf32> to vector<8x64xf32>
    %38 = vector.broadcast %34 : vector<8x1xf32> to vector<8x64xf32>
    %39 = arith.subf %37, %38 : vector<8x64xf32>
    %40 = vector.broadcast %3 : vector<1x64xf32> to vector<8x64xf32>
    %41 = vector.broadcast %34 : vector<8x1xf32> to vector<8x64xf32>
    %42 = arith.subf %40, %41 : vector<8x64xf32>
    %43 = arith.mulf %39, %42 : vector<8x64xf32>
    %44 = vector.broadcast %4 : vector<1x64xf32> to vector<8x64xf32>
    %45 = vector.broadcast %35 : vector<8x1xf32> to vector<8x64xf32>
    %46 = arith.subf %44, %45 : vector<8x64xf32>
    %47 = vector.broadcast %4 : vector<1x64xf32> to vector<8x64xf32>
    %48 = vector.broadcast %35 : vector<8x1xf32> to vector<8x64xf32>
    %49 = arith.subf %47, %48 : vector<8x64xf32>
    %50 = arith.mulf %46, %49 : vector<8x64xf32>
    %51 = arith.addf %43, %50 : vector<8x64xf32>
    %52 = vector.broadcast %5 : vector<1x64xf32> to vector<8x64xf32>
    %53 = vector.broadcast %36 : vector<8x1xf32> to vector<8x64xf32>
    %54 = arith.subf %52, %53 : vector<8x64xf32>
    %55 = vector.broadcast %5 : vector<1x64xf32> to vector<8x64xf32>
    %56 = vector.broadcast %36 : vector<8x1xf32> to vector<8x64xf32>
    %57 = arith.subf %55, %56 : vector<8x64xf32>
    %58 = arith.mulf %54, %57 : vector<8x64xf32>
    %59 = arith.addf %51, %58 : vector<8x64xf32>
    %c0_i32_17 = arith.constant 0 : i32
    %c8_i32_18 = arith.constant 8 : i32
    %60 = arith.addi %c0_i32_17, %c8_i32_18 : i32
    %c1_i32_19 = arith.constant 1 : i32
    %61 = scf.for %arg8 = %c0_i32_17 to %60 step %c1_i32_19 iter_args(%arg9 = %59) -> (vector<8x64xf32>)  : i32 {
      %cst_21 = arith.constant dense<0x7F800000> : vector<8xf32>
      %62 = vector.multi_reduction <minimumf>, %arg9, %cst_21 [1] : vector<8x64xf32> to vector<8xf32>
      %63 = vector.shape_cast %62 : vector<8xf32> to vector<8x1xf32>
      %64 = vector.broadcast %63 : vector<8x1xf32> to vector<8x64xf32>
      %65 = arith.cmpf oeq, %arg9, %64 : vector<8x64xf32>
      %c64_i32 = arith.constant 64 : i32
      %66 = vector.broadcast %c64_i32 : i32 to vector<8x64xi32>
      %67 = arith.select %65, %8, %66 : vector<8x64xi1>, vector<8x64xi32>
      %cst_22 = arith.constant dense<2147483647> : vector<8xi32>
      %68 = vector.multi_reduction <minsi>, %67, %cst_22 [1] : vector<8x64xi32> to vector<8xi32>
      %69 = vector.shape_cast %68 : vector<8xi32> to vector<8x1xi32>
      %70 = vector.broadcast %69 : vector<8x1xi32> to vector<8x64xi32>
      %71 = arith.cmpi eq, %8, %70 : vector<8x64xi32>
      %72 = arith.extui %71 : vector<8x64xi1> to vector<8x64xi32>
      %73 = arith.sitofp %72 : vector<8x64xi32> to vector<8x64xf32>
      %cst_23 = arith.constant dense<0.000000e+00> : vector<8x8xf32>
      %74 = tpu.matmul %1, %73, %cst_23 {dimension_numbers = #tpu.dot_dimension_numbers<[1], [1], [0], [0], [0, 0, 1, 0], [], []>, precision = #tpu.contract_precision<fp32>} : vector<8x64xf32>, vector<8x64xf32>, vector<8x8xf32> -> vector<8x8xf32>
      %75 = vector.extract_strided_slice %74 {offsets = [0, 0], sizes = [3, 8], strides = [1, 1]} : vector<8x8xf32> to vector<3x8xf32>
      %76 = arith.subf %75, %19 : vector<3x8xf32>
      %c0_24 = arith.constant 0 : index
      %77 = arith.index_cast %arg8 : i32 to index
      %c0_25 = arith.constant 0 : index
      %c0_26 = arith.constant 0 : index
      %78 = vector.load %arg5[%c0_24, %77, %c0_25, %c0_26] : memref<1x8x3x8xf32, #tpu.memory_space<vmem>>, vector<1x1x3x8xf32>
      %79 = vector.shape_cast %78 : vector<1x1x3x8xf32> to vector<3x8xf32>
      %80 = vector.shape_cast %76 : vector<3x8xf32> to vector<1x1x3x8xf32>
      tpu.vector_store %arg5[%c0_24, %77, %c0_25, %c0_26], %80 {strides = array<i32>} : memref<1x8x3x8xf32, #tpu.memory_space<vmem>>, vector<1x1x3x8xf32>,
      %81 = vector.extract_strided_slice %74 {offsets = [3, 0], sizes = [3, 8], strides = [1, 1]} : vector<8x8xf32> to vector<3x8xf32>
      %c0_27 = arith.constant 0 : index
      %82 = arith.index_cast %arg8 : i32 to index
      %c0_28 = arith.constant 0 : index
      %c0_29 = arith.constant 0 : index
      %83 = vector.load %arg6[%c0_27, %82, %c0_28, %c0_29] : memref<1x8x3x8xf32, #tpu.memory_space<vmem>>, vector<1x1x3x8xf32>
      %84 = vector.shape_cast %83 : vector<1x1x3x8xf32> to vector<3x8xf32>
      %85 = vector.shape_cast %81 : vector<3x8xf32> to vector<1x1x3x8xf32>
      tpu.vector_store %arg6[%c0_27, %82, %c0_28, %c0_29], %85 {strides = array<i32>} : memref<1x8x3x8xf32, #tpu.memory_space<vmem>>, vector<1x1x3x8xf32>,
      %86 = vector.extract_strided_slice %74 {offsets = [6, 0], sizes = [1, 8], strides = [1, 1]} : vector<8x8xf32> to vector<1x8xf32>
      %cst_30 = arith.constant 5.000000e-01 : f32
      %87 = vector.broadcast %cst_30 : f32 to vector<1x8xf32>
      %88 = arith.addf %86, %87 : vector<1x8xf32>
      %89 = arith.fptosi %88 : vector<1x8xf32> to vector<1x8xi32>
      %c0_31 = arith.constant 0 : index
      %90 = arith.index_cast %arg8 : i32 to index
      %c0_32 = arith.constant 0 : index
      %c0_33 = arith.constant 0 : index
      %91 = vector.load %arg7[%c0_31, %90, %c0_32, %c0_33] : memref<1x8x1x8xi32, #tpu.memory_space<vmem>>, vector<1x1x1x8xi32>
      %92 = vector.shape_cast %91 : vector<1x1x1x8xi32> to vector<1x8xi32>
      %93 = vector.shape_cast %89 : vector<1x8xi32> to vector<1x1x1x8xi32>
      tpu.vector_store %arg7[%c0_31, %90, %c0_32, %c0_33], %93 {strides = array<i32>} : memref<1x8x1x8xi32, #tpu.memory_space<vmem>>, vector<1x1x1x8xi32>,
      %cst_34 = arith.constant 0x7F800000 : f32
      %94 = vector.broadcast %cst_34 : f32 to vector<8x64xf32>
      %95 = arith.select %71, %94, %arg9 : vector<8x64xi1>, vector<8x64xf32>
      scf.yield %95 : vector<8x64xf32>
    }
    %c8_i32_20 = arith.constant 8 : i32
    return
  }
  func.func @transform_0(%arg0: i32) -> (i32, i32, i32) {
    %c0_i32 = arith.constant 0 : i32
    %c0_i32_0 = arith.constant 0 : i32
    %c0_i32_1 = arith.constant 0 : i32
    return %arg0, %c0_i32, %c0_i32_0 : i32, i32, i32
  }
  func.func @transform_1(%arg0: i32) -> (i32, i32, i32) {
    %c0_i32 = arith.constant 0 : i32
    %c0_i32_0 = arith.constant 0 : i32
    %c0_i32_1 = arith.constant 0 : i32
    return %arg0, %c0_i32, %c0_i32_0 : i32, i32, i32
  }
  func.func @transform_2(%arg0: i32) -> (i32, i32, i32) {
    %c0_i32 = arith.constant 0 : i32
    %c0_i32_0 = arith.constant 0 : i32
    %c0_i32_1 = arith.constant 0 : i32
    return %arg0, %c0_i32, %c0_i32_0 : i32, i32, i32
  }
  func.func @transform_3(%arg0: i32) -> (i32, i32, i32) {
    %c0_i32 = arith.constant 0 : i32
    %c0_i32_0 = arith.constant 0 : i32
    %c0_i32_1 = arith.constant 0 : i32
    return %arg0, %c0_i32, %c0_i32_0 : i32, i32, i32
  }
  func.func @transform_4(%arg0: i32) -> (i32, i32, i32, i32) {
    %c0_i32 = arith.constant 0 : i32
    %c0_i32_0 = arith.constant 0 : i32
    %c0_i32_1 = arith.constant 0 : i32
    %c0_i32_2 = arith.constant 0 : i32
    return %arg0, %c0_i32, %c0_i32_0, %c0_i32_1 : i32, i32, i32, i32
  }
  func.func @transform_5(%arg0: i32) -> (i32, i32, i32, i32) {
    %c0_i32 = arith.constant 0 : i32
    %c0_i32_0 = arith.constant 0 : i32
    %c0_i32_1 = arith.constant 0 : i32
    %c0_i32_2 = arith.constant 0 : i32
    return %arg0, %c0_i32, %c0_i32_0, %c0_i32_1 : i32, i32, i32, i32
  }
  func.func @transform_6(%arg0: i32) -> (i32, i32, i32, i32) {
    %c0_i32 = arith.constant 0 : i32
    %c0_i32_0 = arith.constant 0 : i32
    %c0_i32_1 = arith.constant 0 : i32
    %c0_i32_2 = arith.constant 0 : i32
    return %arg0, %c0_i32, %c0_i32_0, %c0_i32_1 : i32, i32, i32, i32
  }
}

</mosaic_0001>

<llo_original>
// kernel: group_forward.1
$region0: #{group_forward.1}
  #allocation0 [shape = 'u32[]', space=smem, size = 0x4, offset = 0x4, fixed_abs, tag = 'smem constant byte address 0x4 - core index']
  #allocation1 [shape = 'u32[72,128]{1,0:T(1,128)}', space=vmem, size = 0x9000, scoped, tag = 'internal scratch']
  %s0 = inlined_call_operand.vmem [shape: f32[2,8,64], index: 0, kind: input, shape index: {}]
  %s1 = inlined_call_operand.hbm [shape: s32[2,1,8], index: 1, kind: output, shape index: {0}]
  %s2 = inlined_call_operand.vmem [shape: f32[2,3,8], index: 2, kind: output, shape index: {1}]
  %s3 = inlined_call_operand.vmem [shape: f32[2,3,8], index: 3, kind: output, shape index: {2}]
  %s4 = inlined_call_operand.vmem [shape: f32[2,8,3,8], index: 4, kind: output, shape index: {3}]
  %s5 = inlined_call_operand.vmem [shape: f32[2,8,3,8], index: 5, kind: output, shape index: {4}]
  %s6 = inlined_call_operand.vmem [shape: s32[2,8,1,8], index: 6, kind: output, shape index: {5}]
  %7 = xla_tuple %s1, %s2, %s3, %s4, %s5, %s6
  %s8 = sld [smem:[#allocation0]]
  $region91: #{group_forward.1} parent=0
    _
  %s10 = ssub.s32 1, %s8
  %s11 = scalar_select 0, %s10, %s8
  $region1: #{group_forward.1} parent=0
    #allocation2 [shape = 'u8[1024]{0}', space=vmem, size = 0x400, scoped, tag = 'output window, operand 0']
    #allocation3 [shape = 's32[2]{0}', space=sflag, size = 0x8, scoped, tag = 'scoped memory for group_forward.1']
    %12 = vsyncpa [#allocation3], 0
    %s13 = scalar_lea.sflag [#allocation3], 1
    %14 = vsyncpa %s13, 0
    loop: start=0, step=1, limit=4
    $region2: #{group_forward.1} parent=1 // loop_pre_header
      _
    $region3: #{group_forward.1} parent=1 // loop_header
      %s16 = sphi 0, %s20
      %p17 = scmp.ge.s32.totalorder %s16, 4
      %s26 = sphi 0, %s28
      %s29 = sphi 0, %s26
      %s30 = sphi 0, %s29
      %s46 = sphi 0, %s30
      %s52 = sphi 0, %s54
      %s55 = sphi 0, %s52
      %s56 = sphi 0, %s55
      %s72 = sphi 0, %s56
      %s78 = sphi 0, %s80
      %s81 = sphi 0, %s78
      %s82 = sphi 0, %s81
      %s98 = sphi 0, %s82
      %s104 = sphi 0, %s106
      %s107 = sphi 0, %s104
      %s108 = sphi 0, %s107
      %s124 = sphi 0, %s108
      %s130 = sphi 0, %s132
      %s133 = sphi 0, %s130
      %s134 = sphi 0, %s133
      %s150 = sphi 0, %s134
      %s156 = sphi 0, %s158
      %s159 = sphi 0, %s156
      %s160 = sphi 0, %s159
      %s176 = sphi 0, %s160
      %s182 = sphi 0, %s184
      %s185 = sphi 0, %s182
      %s186 = sphi 0, %s185
      %s202 = sphi 0, %s186
    $region4: #{group_forward.1} parent=1 // loop_header_branch
      %19 = sbr.rel (%p17) target = $region8
    $region5: #{group_forward.1} parent=1 // loop_body
      %s21 = ssub.s32 %s16, 1
      %s22 = ssub.s32 %s16, 2
      %s23 = sadd.s32 %s16, 1
      %s24 = ssub.s32 %s16, %s23
      %p25 = scmp.eq.s32.totalorder %s24, 0
      %s27 = sadd.s32 %s26, 1
      %s28 = scalar_select %p25, %s26, %s27
      %p31 = pneg %p25
      %p32 = scmp.eq.s32.totalorder %s16, 1
      %p33 = por %p31, %p32
      %p34 = scmp.ne.s32.totalorder %s26, %s29
      %p35 = scmp.eq.s32.totalorder %s16, 0
      %p36 = por %p34, %p35
      %p37 = scmp.ne.s32.totalorder %s26, %s29
      %p38 = scmp.eq.s32.totalorder %s21, 1
      %p39 = por %p37, %p38
      %p40 = scmp.ne.s32.totalorder %s29, %s30
      %p41 = scmp.eq.s32.totalorder %s21, 0
      %p42 = por %p40, %p41
      %p43 = scmp.ne.s32.totalorder %s29, %s30
      %p44 = scmp.eq.s32.totalorder %s22, 1
      %p45 = por %p43, %p44
      %p47 = scmp.ne.s32.totalorder %s30, %s46
      %p48 = scmp.eq.s32.totalorder %s22, 0
      %p49 = por %p47, %p48
      %s50 = ssub.s32 %s16, %s23
      %p51 = scmp.eq.s32.totalorder %s50, 0
      %s53 = sadd.s32 %s52, 1
      %s54 = scalar_select %p51, %s52, %s53
      %p57 = pneg %p51
      %p58 = scmp.eq.s32.totalorder %s16, 1
      %p59 = por %p57, %p58
      %p60 = scmp.ne.s32.totalorder %s52, %s55
      %p61 = scmp.eq.s32.totalorder %s16, 0
      %p62 = por %p60, %p61
      %p63 = scmp.ne.s32.totalorder %s52, %s55
      %p64 = scmp.eq.s32.totalorder %s21, 1
      %p65 = por %p63, %p64
      %p66 = scmp.ne.s32.totalorder %s55, %s56
      %p67 = scmp.eq.s32.totalorder %s21, 0
      %p68 = por %p66, %p67
      %p69 = scmp.ne.s32.totalorder %s55, %s56
      %p70 = scmp.eq.s32.totalorder %s22, 1
      %p71 = por %p69, %p70
      %p73 = scmp.ne.s32.totalorder %s56, %s72
      %p74 = scmp.eq.s32.totalorder %s22, 0
      %p75 = por %p73, %p74
      %s76 = ssub.s32 %s16, %s23
      %p77 = scmp.eq.s32.totalorder %s76, 0
      %s79 = sadd.s32 %s78, 1
      %s80 = scalar_select %p77, %s78, %s79
      %p83 = pneg %p77
      %p84 = scmp.eq.s32.totalorder %s16, 1
      %p85 = por %p83, %p84
      %p86 = scmp.ne.s32.totalorder %s78, %s81
      %p87 = scmp.eq.s32.totalorder %s16, 0
      %p88 = por %p86, %p87
      %p89 = scmp.ne.s32.totalorder %s78, %s81
      %p90 = scmp.eq.s32.totalorder %s21, 1
      %p91 = por %p89, %p90
      %p92 = scmp.ne.s32.totalorder %s81, %s82
      %p93 = scmp.eq.s32.totalorder %s21, 0
      %p94 = por %p92, %p93
      %p95 = scmp.ne.s32.totalorder %s81, %s82
      %p96 = scmp.eq.s32.totalorder %s22, 1
      %p97 = por %p95, %p96
      %p99 = scmp.ne.s32.totalorder %s82, %s98
      %p100 = scmp.eq.s32.totalorder %s22, 0
      %p101 = por %p99, %p100
      %s102 = ssub.s32 %s16, %s23
      %p103 = scmp.eq.s32.totalorder %s102, 0
      %s105 = sadd.s32 %s104, 1
      %s106 = scalar_select %p103, %s104, %s105
      %p109 = pneg %p103
      %p110 = scmp.eq.s32.totalorder %s16, 1
      %p111 = por %p109, %p110
      %p112 = scmp.ne.s32.totalorder %s104, %s107
      %p113 = scmp.eq.s32.totalorder %s16, 0
      %p114 = por %p112, %p113
      %p115 = scmp.ne.s32.totalorder %s104, %s107
      %p116 = scmp.eq.s32.totalorder %s21, 1
      %p117 = por %p115, %p116
      %p118 = scmp.ne.s32.totalorder %s107, %s108
      %p119 = scmp.eq.s32.totalorder %s21, 0
      %p120 = por %p118, %p119
      %p121 = scmp.ne.s32.totalorder %s107, %s108
      %p122 = scmp.eq.s32.totalorder %s22, 1
      %p123 = por %p121, %p122
      %p125 = scmp.ne.s32.totalorder %s108, %s124
      %p126 = scmp.eq.s32.totalorder %s22, 0
      %p127 = por %p125, %p126
      %s128 = ssub.s32 %s16, %s23
      %p129 = scmp.eq.s32.totalorder %s128, 0
      %s131 = sadd.s32 %s130, 1
      %s132 = scalar_select %p129, %s130, %s131
      %p135 = pneg %p129
      %p136 = scmp.eq.s32.totalorder %s16, 1
      %p137 = por %p135, %p136
      %p138 = scmp.ne.s32.totalorder %s130, %s133
      %p139 = scmp.eq.s32.totalorder %s16, 0
      %p140 = por %p138, %p139
      %p141 = scmp.ne.s32.totalorder %s130, %s133
      %p142 = scmp.eq.s32.totalorder %s21, 1
      %p143 = por %p141, %p142
      %p144 = scmp.ne.s32.totalorder %s133, %s134
      %p145 = scmp.eq.s32.totalorder %s21, 0
      %p146 = por %p144, %p145
      %p147 = scmp.ne.s32.totalorder %s133, %s134
      %p148 = scmp.eq.s32.totalorder %s22, 1
      %p149 = por %p147, %p148
      %p151 = scmp.ne.s32.totalorder %s134, %s150
      %p152 = scmp.eq.s32.totalorder %s22, 0
      %p153 = por %p151, %p152
      %s154 = ssub.s32 %s16, %s23
      %p155 = scmp.eq.s32.totalorder %s154, 0
      %s157 = sadd.s32 %s156, 1
      %s158 = scalar_select %p155, %s156, %s157
      %p161 = pneg %p155
      %p162 = scmp.eq.s32.totalorder %s16, 1
      %p163 = por %p161, %p162
      %p164 = scmp.ne.s32.totalorder %s156, %s159
      %p165 = scmp.eq.s32.totalorder %s16, 0
      %p166 = por %p164, %p165
      %p167 = scmp.ne.s32.totalorder %s156, %s159
      %p168 = scmp.eq.s32.totalorder %s21, 1
      %p169 = por %p167, %p168
      %p170 = scmp.ne.s32.totalorder %s159, %s160
      %p171 = scmp.eq.s32.totalorder %s21, 0
      %p172 = por %p170, %p171
      %p173 = scmp.ne.s32.totalorder %s159, %s160
      %p174 = scmp.eq.s32.totalorder %s22, 1
      %p175 = por %p173, %p174
      %p177 = scmp.ne.s32.totalorder %s160, %s176
      %p178 = scmp.eq.s32.totalorder %s22, 0
      %p179 = por %p177, %p178
      %s180 = ssub.s32 %s16, %s23
      %p181 = scmp.eq.s32.totalorder %s180, 0
      %s183 = sadd.s32 %s182, 1
      %s184 = scalar_select %p181, %s182, %s183
      %p187 = pneg %p181
      %p188 = scmp.eq.s32.totalorder %s16, 1
      %p189 = por %p187, %p188
      %p190 = scmp.ne.s32.totalorder %s182, %s185
      %p191 = scmp.eq.s32.totalorder %s16, 0
      %p192 = por %p190, %p191
      %p193 = scmp.ne.s32.totalorder %s182, %s185
      %p194 = scmp.eq.s32.totalorder %s21, 1
      %p195 = por %p193, %p194
      %p196 = scmp.ne.s32.totalorder %s185, %s186
      %p197 = scmp.eq.s32.totalorder %s21, 0
      %p198 = por %p196, %p197
      %p199 = scmp.ne.s32.totalorder %s185, %s186
      %p200 = scmp.eq.s32.totalorder %s22, 1
      %p201 = por %p199, %p200
      %p203 = scmp.ne.s32.totalorder %s186, %s202
      %p204 = scmp.eq.s32.totalorder %s22, 0
      %p205 = por %p203, %p204
      %p206 = scmp.le.s32.totalorder 1, %s16
      %p207 = scmp.lt.s32.totalorder %s16, 3
      %p208 = pnand %p206, %p207
      %p209 = pneg %p208
      // Predicated region
      $region9: #{group_forward.1} parent=5 // pred_check
        _
      $region10: #{group_forward.1} parent=5 // pred_check_branch
        %211 = sbr.rel (%p208) target = $region12
      $region11: #{group_forward.1} parent=5 // pred_region
        %s212 = ssub.s32 %s16, 1
      $region12: #{group_forward.1} parent=5 // pred_fallthru
        _
      %p213 = scmp.lt.s32.totalorder %s16, 2
      // Predicated region
      $region13: #{group_forward.1} parent=5 // pred_check
        %p214 = pneg %p213
      $region14: #{group_forward.1} parent=5 // pred_check_branch
        %216 = sbr.rel (%p214) target = $region16
      $region15: #{group_forward.1} parent=5 // pred_region
        // Predicated region
        $region17: #{group_forward.1} parent=15 // pred_check
          %p217 = pneg %p36
        $region18: #{group_forward.1} parent=15 // pred_check_branch
          %219 = sbr.rel (%p217) target = $region20
        $region19: #{group_forward.1} parent=15 // pred_region
          %p220 = scmp.lt.s32.totalorder %s16, 1
          %s221 = scalar_select %p220, %s16, 1
          %s222 = smul.addr %s221, 8
          %s223 = scalar_lea.vmem %s0, %s222
        $region20: #{group_forward.1} parent=15 // pred_fallthru
          _
      $region16: #{group_forward.1} parent=5 // pred_fallthru
        _
      %p224 = scmp.le.s32.totalorder 1, %s16
      %p225 = scmp.lt.s32.totalorder %s16, 3
      %p226 = pnand %p224, %p225
      %p227 = pneg %p226
      // Predicated region
      $region21: #{group_forward.1} parent=5 // pred_check
        _
      $region22: #{group_forward.1} parent=5 // pred_check_branch
        %229 = sbr.rel (%p226) target = $region24
      $region23: #{group_forward.1} parent=5 // pred_region
        %s230 = ssub.s32 %s16, 1
        %p231 = scmp.lt.s32.totalorder %s21, 1
        %s232 = scalar_select %p231, %s21, 1
        %s233 = smul.addr %s232, 8
        %s234 = scalar_lea.vmem %s0, %s233
        %p235 = pneg %p42
        %p236 = pneg %p39
        %p237 = pneg %p68
        %p238 = pneg %p65
        %s239 = sand.u32 %s55, 1
        %s240 = scalar_lea.sflag [#allocation3], %s239
        %s241 = sand.u32 %s55, 1
        %s242 = scalar_lea.vmem [#allocation2], %s241
        %p243 = pneg %p94
        %p244 = pneg %p91
        %p245 = scmp.lt.s32.totalorder %s21, 1
        %s246 = scalar_select %p245, %s21, 1
        %s247 = smul.addr %s246, 4
        %s248 = scalar_lea.vmem %s2, %s247
        %p249 = pneg %p120
        %p250 = pneg %p117
        %p251 = scmp.lt.s32.totalorder %s21, 1
        %s252 = scalar_select %p251, %s21, 1
        %s253 = smul.addr %s252, 4
        %s254 = scalar_lea.vmem %s3, %s253
        %p255 = pneg %p146
        %p256 = pneg %p143
        %p257 = scmp.lt.s32.totalorder %s21, 1
        %s258 = scalar_select %p257, %s21, 1
        %s259 = smul.addr %s258, 8
        %s260 = smul.addr %s259, 4
        %s261 = scalar_lea.vmem %s4, %s260
        %p262 = pneg %p172
        %p263 = pneg %p169
        %p264 = scmp.lt.s32.totalorder %s21, 1
        %s265 = scalar_select %p264, %s21, 1
        %s266 = smul.addr %s265, 8
        %s267 = smul.addr %s266, 4
        %s268 = scalar_lea.vmem %s5, %s267
        %p269 = pneg %p198
        %p270 = pneg %p195
        %p271 = scmp.lt.s32.totalorder %s21, 1
        %s272 = scalar_select %p271, %s21, 1
        %s273 = smul.addr %s272, 8
        %s274 = scalar_lea.vmem %s6, %s273
        %p275 = scmp.lt.s32.totalorder %s21, 1
        %s276 = scalar_select %p275, %s21, 1
        %s277 = smul.addr %s276, 8
        %s278 = scalar_lea.vmem %s0, %s277
        %p279 = scmp.lt.s32.totalorder %s21, 1
        %s280 = scalar_select %p279, %s21, 1
        %s281 = smul.addr %s280, 4
        %s282 = scalar_lea.vmem %s2, %s281
        %p283 = scmp.lt.s32.totalorder %s21, 1
        %s284 = scalar_select %p283, %s21, 1
        %s285 = smul.addr %s284, 4
        %s286 = scalar_lea.vmem %s3, %s285
        %p287 = scmp.lt.s32.totalorder %s21, 1
        %s288 = scalar_select %p287, %s21, 1
        %s289 = smul.addr %s288, 8
        %s290 = smul.addr %s289, 4
        %s291 = scalar_lea.vmem %s4, %s290
        %p292 = scmp.lt.s32.totalorder %s21, 1
        %s293 = scalar_select %p292, %s21, 1
        %s294 = smul.addr %s293, 8
        %s295 = smul.addr %s294, 4
        %s296 = scalar_lea.vmem %s5, %s295
        %p297 = scmp.lt.s32.totalorder %s21, 1
        %s298 = scalar_select %p297, %s21, 1
        %s299 = smul.addr %s298, 8
        %s300 = scalar_lea.vmem %s6, %s299
        %v301 = vld [vmem:[%s278] sm:$0xff]
        %v302 = vlaneseq
        %v303 = vand.u32 %v302, 127
        %v304 = vlaneseq
        %v305 = vshrl.u32 %v304, 7
        loop: start=0, step=1, limit=8
        $region25: #{group_forward.1} parent=23 // loop_pre_header
          _
        $region26: #{group_forward.1} parent=23 // loop_header
          %s307 = sphi 0, %s311
          %p308 = scmp.ge.s32.totalorder %s307, 8
          %v312 = vphi 1e+10, %v336
          %s313 = sphi 0, %s375
          %v314 = vphi 0, %v318
        $region27: #{group_forward.1} parent=23 // loop_header_branch
          %310 = sbr.rel (%p308) target = $region31
        $region28: #{group_forward.1} parent=23 // loop_body
          %v315 = vstv %s307
          %vm316 = vcmp.eq.s32.totalorder %v305, %v315
          %v317 = vstv %s313
          %v318 = vsel %vm316, %v317, %v314
          %vm319 = vcmp.eq.s32.totalorder %v303, %v317
          %v320 = vsel %vm319, 1, 0
          %vm321 = vcmp.eq.s32.totalorder %v320, 1
          %v322 = vsel %vm321, %v301, 0.0
          %vm323 = vcmask 518144
          %v324 = vsel %vm323, %v322, 0.0
          %325 = vadd.xlane.f32.xlu0 %v324
          %v326 = vpop.xlane.xlu0 %325
          %v327 = vsub.f32 %v301, %v326
          %v328 = vmul.f32 %v327, %v327
          %v330 = vrot.slane %v328, 1
          %v332 = vadd.f32 %v328, %v330
          %v333 = vrot.slane %v328, 2
          %v335 = vadd.f32 %v332, %v333
          %v336 = vmin.f32 %v312, %v335
          %vm337 = vcmask 516096
          %v338 = vsel %vm337, %v336, -inf
          %339 = vmax.xlane.f32.xlu0 %v338
          %v340 = vpop.xlane.xlu0 %339
          %v341 = vrot.slane %v340, 4
          %v342 = vmax.f32 %v340, %v341
          %v343 = vrot.slane %v342, 2
          %v344 = vmax.f32 %v342, %v343
          %v345 = vrot.slane %v344, 1
          %v346 = vmax.f32 %v344, %v345
          %s347 = vtos %v346
          %v348 = vstv %s347
          %vm349 = vcmp.eq.f32.partialorder %v336, %v348
          %v350 = vsel %vm349, %v303, 64
          %v351 = vsel %vm337, %v350, 2147483647
          %v352 = vand.u32 %v351, 65535
          %v353 = vshra.s32 %v351, 16
          %v354 = vcvt.s32.f32 %v352
          %v355 = vcvt.s32.f32 %v353
          %356 = vmin.xlane.f32.xlu0 %v355
          %v357 = vpop.xlane.xlu0 %356
          %vm358 = vcmp.eq.f32.partialorder %v355, %v357
          %v359 = vsel %vm358, %v354, inf
          %360 = vmin.xlane.f32.xlu0 %v359
          %v361 = vpop.xlane.xlu0 %360
          %v362 = vcvt.f32.s32 %v361
          %v363 = vcvt.f32.s32 %v357
          %v364 = vshll.u32 %v363, 16
          %v365 = vadd.s32 %v364, %v362
          %v366 = vrot.slane %v365, 4
          %vm367 = vcmp.lt.s32.totalorder %v365, %v366
          %v368 = vsel %vm367, %v365, %v366
          %v369 = vrot.slane %v368, 2
          %vm370 = vcmp.lt.s32.totalorder %v368, %v369
          %v371 = vsel %vm370, %v368, %v369
          %v372 = vrot.slane %v371, 1
          %vm373 = vcmp.lt.s32.totalorder %v371, %v372
          %v374 = vsel %vm373, %v371, %v372
          %s375 = vtos %v374
        $region29: #{group_forward.1} parent=23 // loop_footer
          %s311 = sadd.s32 1, %s307
        $region30: #{group_forward.1} parent=23 // loop_footer_branch
          %306 = sbr.rel target = $region26
        $region31: #{group_forward.1} parent=23 // loop_exit
          _
        %vm376 = vcmp.eq.s32.totalorder %v303, %v314
        %v377 = vsel %vm376, 1, 0
        %v378 = vcvt.s32.f32 %v377
        %vm379 = vcmask 523264
        %v381 = vsel %vm379, %v301, 0
        %v384 = vsel %vm379, %v378, 0
        %386 = vmatpush.xpose.msra.mxu0 0.0
        %387 = vmatpush.xpose.msra.mxu0 0.0
        %388 = vmatpush.xpose.msra.mxu0 0.0
        %389 = vmatpush.xpose.msra.mxu0 0.0
        %390 = vmatpush.xpose.msra.mxu0 0.0
        %391 = vmatpush.xpose.msra.mxu0 0.0
        %392 = vmatpush.xpose.msra.mxu0 0.0
        %393 = vmatpush.xpose.msra.mxu0 0.0
        %394 = vmatpush.xpose.msra.mxu0 0.0
        %395 = vmatpush.xpose.msra.mxu0 0.0
        %396 = vmatpush.xpose.msra.mxu0 0.0
        %397 = vmatpush.xpose.msra.mxu0 0.0
        %398 = vmatpush.xpose.msra.mxu0 0.0
        %399 = vmatpush.xpose.msra.mxu0 0.0
        %400 = vmatpush.xpose.msra.mxu0 0.0
        %v401 = vand.u32 %v384, 4294901760
        %402 = vmatpush.xpose.msra.mxu0 %v401
        %v403 = vand.u32 %v381, 4294901760
        %v404 = vsub.f32 %v381, %v403
        %v405 = vand.u32 %v404, 4294901760
        %v406 = vsub.f32 %v404, %v405
        %v407 = vand.u32 %v406, 4294901760
        %408 = vmatmul.f32.gmra.mxu0 %v407
        %v409 = vpop.f32.mrf.mxu0
        %v410 = vadd.f32 0.0, %v409
        %411 = vdwg.mxu0
        %412 = vmatpush.xpose.msra.mxu0 0.0
        %413 = vmatpush.xpose.msra.mxu0 0.0
        %414 = vmatpush.xpose.msra.mxu0 0.0
        %415 = vmatpush.xpose.msra.mxu0 0.0
        %416 = vmatpush.xpose.msra.mxu0 0.0
        %417 = vmatpush.xpose.msra.mxu0 0.0
        %418 = vmatpush.xpose.msra.mxu0 0.0
        %419 = vmatpush.xpose.msra.mxu0 0.0
        %420 = vmatpush.xpose.msra.mxu0 0.0
        %421 = vmatpush.xpose.msra.mxu0 0.0
        %422 = vmatpush.xpose.msra.mxu0 0.0
        %423 = vmatpush.xpose.msra.mxu0 0.0
        %424 = vmatpush.xpose.msra.mxu0 0.0
        %425 = vmatpush.xpose.msra.mxu0 0.0
        %426 = vmatpush.xpose.msra.mxu0 0.0
        %v427 = vand.u32 %v384, 4294901760
        %v428 = vsub.f32 %v384, %v427
        %v429 = vand.u32 %v428, 4294901760
        %v430 = vsub.f32 %v428, %v429
        %v431 = vand.u32 %v430, 4294901760
        %432 = vmatpush.xpose.msra.mxu0 %v431
        %v433 = vand.u32 %v381, 4294901760
        %434 = vmatmul.f32.gmra.mxu0 %v433
        %v435 = vpop.f32.mrf.mxu0
        %v436 = vadd.f32 %v410, %v435
        %437 = vdwg.mxu0
        %438 = vmatpush.xpose.msra.mxu0 0.0
        %439 = vmatpush.xpose.msra.mxu0 0.0
        %440 = vmatpush.xpose.msra.mxu0 0.0
        %441 = vmatpush.xpose.msra.mxu0 0.0
        %442 = vmatpush.xpose.msra.mxu0 0.0
        %443 = vmatpush.xpose.msra.mxu0 0.0
        %444 = vmatpush.xpose.msra.mxu0 0.0
        %445 = vmatpush.xpose.msra.mxu0 0.0
        %446 = vmatpush.xpose.msra.mxu0 0.0
        %447 = vmatpush.xpose.msra.mxu0 0.0
        %448 = vmatpush.xpose.msra.mxu0 0.0
        %449 = vmatpush.xpose.msra.mxu0 0.0
        %450 = vmatpush.xpose.msra.mxu0 0.0
        %451 = vmatpush.xpose.msra.mxu0 0.0
        %452 = vmatpush.xpose.msra.mxu0 0.0
        %v453 = vand.u32 %v384, 4294901760
        %v454 = vsub.f32 %v384, %v453
        %455 = vmatpush.xpose.msra.mxu0 %v454
        %v456 = vand.u32 %v381, 4294901760
        %v457 = vsub.f32 %v381, %v456
        %458 = vmatmul.f32.gmra.mxu0 %v457
        %v459 = vpop.f32.mrf.mxu0
        %v460 = vadd.f32 %v436, %v459
        %461 = vdwg.mxu0
        %462 = vmatpush.xpose.msra.mxu0 0.0
        %463 = vmatpush.xpose.msra.mxu0 0.0
        %464 = vmatpush.xpose.msra.mxu0 0.0
        %465 = vmatpush.xpose.msra.mxu0 0.0
        %466 = vmatpush.xpose.msra.mxu0 0.0
        %467 = vmatpush.xpose.msra.mxu0 0.0
        %468 = vmatpush.xpose.msra.mxu0 0.0
        %469 = vmatpush.xpose.msra.mxu0 0.0
        %470 = vmatpush.xpose.msra.mxu0 0.0
        %471 = vmatpush.xpose.msra.mxu0 0.0
        %472 = vmatpush.xpose.msra.mxu0 0.0
        %473 = vmatpush.xpose.msra.mxu0 0.0
        %474 = vmatpush.xpose.msra.mxu0 0.0
        %475 = vmatpush.xpose.msra.mxu0 0.0
        %476 = vmatpush.xpose.msra.mxu0 0.0
        %v477 = vand.u32 %v384, 4294901760
        %478 = vmatpush.xpose.msra.mxu0 %v477
        %v479 = vand.u32 %v381, 4294901760
        %v480 = vsub.f32 %v381, %v479
        %v481 = vand.u32 %v480, 4294901760
        %482 = vmatmul.f32.gmra.mxu0 %v481
        %v483 = vpop.f32.mrf.mxu0
        %v484 = vadd.f32 %v460, %v483
        %485 = vdwg.mxu0
        %486 = vmatpush.xpose.msra.mxu0 0.0
        %487 = vmatpush.xpose.msra.mxu0 0.0
        %488 = vmatpush.xpose.msra.mxu0 0.0
        %489 = vmatpush.xpose.msra.mxu0 0.0
        %490 = vmatpush.xpose.msra.mxu0 0.0
        %491 = vmatpush.xpose.msra.mxu0 0.0
        %492 = vmatpush.xpose.msra.mxu0 0.0
        %493 = vmatpush.xpose.msra.mxu0 0.0
        %494 = vmatpush.xpose.msra.mxu0 0.0
        %495 = vmatpush.xpose.msra.mxu0 0.0
        %496 = vmatpush.xpose.msra.mxu0 0.0
        %497 = vmatpush.xpose.msra.mxu0 0.0
        %498 = vmatpush.xpose.msra.mxu0 0.0
        %499 = vmatpush.xpose.msra.mxu0 0.0
        %500 = vmatpush.xpose.msra.mxu0 0.0
        %v501 = vand.u32 %v384, 4294901760
        %v502 = vsub.f32 %v384, %v501
        %v503 = vand.u32 %v502, 4294901760
        %504 = vmatpush.xpose.msra.mxu0 %v503
        %v505 = vand.u32 %v381, 4294901760
        %506 = vmatmul.f32.gmra.mxu0 %v505
        %v507 = vpop.f32.mrf.mxu0
        %v508 = vadd.f32 %v484, %v507
        %509 = vdwg.mxu0
        %510 = vmatpush.xpose.msra.mxu0 0.0
        %511 = vmatpush.xpose.msra.mxu0 0.0
        %512 = vmatpush.xpose.msra.mxu0 0.0
        %513 = vmatpush.xpose.msra.mxu0 0.0
        %514 = vmatpush.xpose.msra.mxu0 0.0
        %515 = vmatpush.xpose.msra.mxu0 0.0
        %516 = vmatpush.xpose.msra.mxu0 0.0
        %517 = vmatpush.xpose.msra.mxu0 0.0
        %518 = vmatpush.xpose.msra.mxu0 0.0
        %519 = vmatpush.xpose.msra.mxu0 0.0
        %520 = vmatpush.xpose.msra.mxu0 0.0
        %521 = vmatpush.xpose.msra.mxu0 0.0
        %522 = vmatpush.xpose.msra.mxu0 0.0
        %523 = vmatpush.xpose.msra.mxu0 0.0
        %524 = vmatpush.xpose.msra.mxu0 0.0
        %v525 = vand.u32 %v384, 4294901760
        %526 = vmatpush.xpose.msra.mxu0 %v525
        %v527 = vand.u32 %v381, 4294901760
        %528 = vmatmul.f32.gmra.mxu0 %v527
        %v529 = vpop.f32.mrf.mxu0
        %v530 = vadd.f32 %v508, %v529
        %531 = vdwg.mxu0
        %532 = vmatpush.xpose.msra.mxu0 0.0
        %533 = vmatpush.xpose.msra.mxu0 0.0
        %534 = vmatpush.xpose.msra.mxu0 0.0
        %535 = vmatpush.xpose.msra.mxu0 0.0
        %536 = vmatpush.xpose.msra.mxu0 0.0
        %537 = vmatpush.xpose.msra.mxu0 0.0
        %538 = vmatpush.xpose.msra.mxu0 0.0
        %539 = vmatpush.xpose.msra.mxu0 0.0
        %540 = vmatpush.xpose.msra.mxu0 0.0
        %541 = vmatpush.xpose.msra.mxu0 0.0
        %542 = vmatpush.xpose.msra.mxu0 0.0
        %543 = vmatpush.xpose.msra.mxu0 0.0
        %544 = vmatpush.xpose.msra.mxu0 0.0
        %545 = vmatpush.xpose.msra.mxu0 0.0
        %546 = vmatpush.xpose.msra.mxu0 0.0
        %v547 = vand.u32 %v381, 4294901760
        %548 = vmatpush.xpose.msra.mxu0 %v547
        %v549 = vand.u32 %v384, 4294901760
        %v550 = vsub.f32 %v384, %v549
        %v551 = vand.u32 %v550, 4294901760
        %v552 = vsub.f32 %v550, %v551
        %v553 = vand.u32 %v552, 4294901760
        %554 = vmatmul.f32.gmra.mxu0 %v553
        %v555 = vpop.f32.mrf.mxu0
        %v556 = vadd.f32 0.0, %v555
        %557 = vdwg.mxu0
        %558 = vmatpush.xpose.msra.mxu0 0.0
        %559 = vmatpush.xpose.msra.mxu0 0.0
        %560 = vmatpush.xpose.msra.mxu0 0.0
        %561 = vmatpush.xpose.msra.mxu0 0.0
        %562 = vmatpush.xpose.msra.mxu0 0.0
        %563 = vmatpush.xpose.msra.mxu0 0.0
        %564 = vmatpush.xpose.msra.mxu0 0.0
        %565 = vmatpush.xpose.msra.mxu0 0.0
        %566 = vmatpush.xpose.msra.mxu0 0.0
        %567 = vmatpush.xpose.msra.mxu0 0.0
        %568 = vmatpush.xpose.msra.mxu0 0.0
        %569 = vmatpush.xpose.msra.mxu0 0.0
        %570 = vmatpush.xpose.msra.mxu0 0.0
        %571 = vmatpush.xpose.msra.mxu0 0.0
        %572 = vmatpush.xpose.msra.mxu0 0.0
        %v573 = vand.u32 %v381, 4294901760
        %v574 = vsub.f32 %v381, %v573
        %v575 = vand.u32 %v574, 4294901760
        %v576 = vsub.f32 %v574, %v575
        %v577 = vand.u32 %v576, 4294901760
        %578 = vmatpush.xpose.msra.mxu0 %v577
        %v579 = vand.u32 %v384, 4294901760
        %580 = vmatmul.f32.gmra.mxu0 %v579
        %v581 = vpop.f32.mrf.mxu0
        %v582 = vadd.f32 %v556, %v581
        %583 = vdwg.mxu0
        %584 = vmatpush.xpose.msra.mxu0 0.0
        %585 = vmatpush.xpose.msra.mxu0 0.0
        %586 = vmatpush.xpose.msra.mxu0 0.0
        %587 = vmatpush.xpose.msra.mxu0 0.0
        %588 = vmatpush.xpose.msra.mxu0 0.0
        %589 = vmatpush.xpose.msra.mxu0 0.0
        %590 = vmatpush.xpose.msra.mxu0 0.0
        %591 = vmatpush.xpose.msra.mxu0 0.0
        %592 = vmatpush.xpose.msra.mxu0 0.0
        %593 = vmatpush.xpose.msra.mxu0 0.0
        %594 = vmatpush.xpose.msra.mxu0 0.0
        %595 = vmatpush.xpose.msra.mxu0 0.0
        %596 = vmatpush.xpose.msra.mxu0 0.0
        %597 = vmatpush.xpose.msra.mxu0 0.0
        %598 = vmatpush.xpose.msra.mxu0 0.0
        %v599 = vand.u32 %v381, 4294901760
        %v600 = vsub.f32 %v381, %v599
        %601 = vmatpush.xpose.msra.mxu0 %v600
        %v602 = vand.u32 %v384, 4294901760
        %v603 = vsub.f32 %v384, %v602
        %604 = vmatmul.f32.gmra.mxu0 %v603
        %v605 = vpop.f32.mrf.mxu0
        %v606 = vadd.f32 %v582, %v605
        %607 = vdwg.mxu0
        %608 = vmatpush.xpose.msra.mxu0 0.0
        %609 = vmatpush.xpose.msra.mxu0 0.0
        %610 = vmatpush.xpose.msra.mxu0 0.0
        %611 = vmatpush.xpose.msra.mxu0 0.0
        %612 = vmatpush.xpose.msra.mxu0 0.0
        %613 = vmatpush.xpose.msra.mxu0 0.0
        %614 = vmatpush.xpose.msra.mxu0 0.0
        %615 = vmatpush.xpose.msra.mxu0 0.0
        %616 = vmatpush.xpose.msra.mxu0 0.0
        %617 = vmatpush.xpose.msra.mxu0 0.0
        %618 = vmatpush.xpose.msra.mxu0 0.0
        %619 = vmatpush.xpose.msra.mxu0 0.0
        %620 = vmatpush.xpose.msra.mxu0 0.0
        %621 = vmatpush.xpose.msra.mxu0 0.0
        %622 = vmatpush.xpose.msra.mxu0 0.0
        %v623 = vand.u32 %v381, 4294901760
        %624 = vmatpush.xpose.msra.mxu0 %v623
        %v625 = vand.u32 %v384, 4294901760
        %v626 = vsub.f32 %v384, %v625
        %v627 = vand.u32 %v626, 4294901760
        %628 = vmatmul.f32.gmra.mxu0 %v627
        %v629 = vpop.f32.mrf.mxu0
        %v630 = vadd.f32 %v606, %v629
        %631 = vdwg.mxu0
        %632 = vmatpush.xpose.msra.mxu0 0.0
        %633 = vmatpush.xpose.msra.mxu0 0.0
        %634 = vmatpush.xpose.msra.mxu0 0.0
        %635 = vmatpush.xpose.msra.mxu0 0.0
        %636 = vmatpush.xpose.msra.mxu0 0.0
        %637 = vmatpush.xpose.msra.mxu0 0.0
        %638 = vmatpush.xpose.msra.mxu0 0.0
        %639 = vmatpush.xpose.msra.mxu0 0.0
        %640 = vmatpush.xpose.msra.mxu0 0.0
        %641 = vmatpush.xpose.msra.mxu0 0.0
        %642 = vmatpush.xpose.msra.mxu0 0.0
        %643 = vmatpush.xpose.msra.mxu0 0.0
        %644 = vmatpush.xpose.msra.mxu0 0.0
        %645 = vmatpush.xpose.msra.mxu0 0.0
        %646 = vmatpush.xpose.msra.mxu0 0.0
        %v647 = vand.u32 %v381, 4294901760
        %v648 = vsub.f32 %v381, %v647
        %v649 = vand.u32 %v648, 4294901760
        %650 = vmatpush.xpose.msra.mxu0 %v649
        %v651 = vand.u32 %v384, 4294901760
        %652 = vmatmul.f32.gmra.mxu0 %v651
        %v653 = vpop.f32.mrf.mxu0
        %v654 = vadd.f32 %v630, %v653
        %655 = vdwg.mxu0
        %656 = vmatpush.xpose.msra.mxu0 0.0
        %657 = vmatpush.xpose.msra.mxu0 0.0
        %658 = vmatpush.xpose.msra.mxu0 0.0
        %659 = vmatpush.xpose.msra.mxu0 0.0
        %660 = vmatpush.xpose.msra.mxu0 0.0
        %661 = vmatpush.xpose.msra.mxu0 0.0
        %662 = vmatpush.xpose.msra.mxu0 0.0
        %663 = vmatpush.xpose.msra.mxu0 0.0
        %664 = vmatpush.xpose.msra.mxu0 0.0
        %665 = vmatpush.xpose.msra.mxu0 0.0
        %666 = vmatpush.xpose.msra.mxu0 0.0
        %667 = vmatpush.xpose.msra.mxu0 0.0
        %668 = vmatpush.xpose.msra.mxu0 0.0
        %669 = vmatpush.xpose.msra.mxu0 0.0
        %670 = vmatpush.xpose.msra.mxu0 0.0
        %v671 = vand.u32 %v381, 4294901760
        %672 = vmatpush.xpose.msra.mxu0 %v671
        %v673 = vand.u32 %v384, 4294901760
        %674 = vmatmul.f32.gmra.mxu0 %v673
        %v675 = vpop.f32.mrf.mxu0
        %v676 = vadd.f32 %v654, %v675
        %677 = vdwg.mxu0
        %vm678 = vcmask 59392
        %679 = vst.msk [vmem:[%s282] sm:$0x7] %vm678, %v530
        %vm680 = vcmask 62467
        %681 = vst.msk [vmem:[%s286 - $0x3] sm:$0x38] %vm680, %v530
        %v682 = vadd.f32 %v530, 0.5
        %v683 = vcvt.f32.s32.to.zero.pseudo %v682
        %vm684 = vcmask 63494
        %685 = vst.msk [vmem:[%s242 - $0x6] sm:$0x40] %vm684, %v683
        %v686 = vperm.slane %v301, 0
        %688 = vset.pattern.permute.xlu0 0
        %689 = vperm.xlu0 %688, %v676
        %v690 = vpop.permute.xlu0 %689
        %v692 = vsub.f32 %v686, %v690
        %v693 = vmul.f32 %v692, %v692
        %v694 = vperm.slane %v301, 1
        %695 = vset.pattern.permute.xlu0 1
        %696 = vperm.xlu0 %695, %v676
        %v697 = vpop.permute.xlu0 %696
        %v699 = vsub.f32 %v694, %v697
        %v700 = vmul.f32 %v699, %v699
        %v701 = vadd.f32 %v693, %v700
        %v702 = vperm.slane %v301, 2
        %703 = vset.pattern.permute.xlu0 2
        %704 = vperm.xlu0 %703, %v676
        %v705 = vpop.permute.xlu0 %704
        %v707 = vsub.f32 %v702, %v705
        %v708 = vmul.f32 %v707, %v707
        %v709 = vadd.f32 %v701, %v708
        loop: start=0, step=1, limit=8
        $region32: #{group_forward.1} parent=23 // loop_pre_header
          _
        $region33: #{group_forward.1} parent=23 // loop_header
          %s711 = sphi 0, %s715
          %p712 = scmp.ge.s32.totalorder %s711, 8
          %v716 = vphi %v709, %v899
        $region34: #{group_forward.1} parent=23 // loop_header_branch
          %714 = sbr.rel (%p712) target = $region38
        $region35: #{group_forward.1} parent=23 // loop_body
          %v717 = vsel %vm379, %v716, inf
          %718 = vmin.xlane.f32.xlu0 %v717
          %v719 = vpop.xlane.xlu0 %718
          %vm720 = vcmp.eq.f32.partialorder %v716, %v719
          %v721 = vsel %vm720, %v303, 64
          %v722 = vsel %vm379, %v721, 2147483647
          %v723 = vand.u32 %v722, 65535
          %v724 = vshra.s32 %v722, 16
          %v725 = vcvt.s32.f32 %v723
          %v726 = vcvt.s32.f32 %v724
          %727 = vmin.xlane.f32.xlu0 %v726
          %v728 = vpop.xlane.xlu0 %727
          %vm729 = vcmp.eq.f32.partialorder %v726, %v728
          %v730 = vsel %vm729, %v725, inf
          %731 = vmin.xlane.f32.xlu0 %v730
          %v732 = vpop.xlane.xlu0 %731
          %v733 = vcvt.f32.s32 %v732
          %v734 = vcvt.f32.s32 %v728
          %v735 = vshll.u32 %v734, 16
          %v736 = vadd.s32 %v735, %v733
          %vm737 = vcmp.eq.s32.totalorder %v303, %v736
          %v738 = vsel %vm737, 1, 0
          %v739 = vcvt.s32.f32 %v738
          %v741 = vsel %vm379, %v739, 0
          %743 = vmatpush.xpose.msra.mxu0 0.0
          %744 = vmatpush.xpose.msra.mxu0 0.0
          %745 = vmatpush.xpose.msra.mxu0 0.0
          %746 = vmatpush.xpose.msra.mxu0 0.0
          %747 = vmatpush.xpose.msra.mxu0 0.0
          %748 = vmatpush.xpose.msra.mxu0 0.0
          %749 = vmatpush.xpose.msra.mxu0 0.0
          %750 = vmatpush.xpose.msra.mxu0 0.0
          %751 = vmatpush.xpose.msra.mxu0 0.0
          %752 = vmatpush.xpose.msra.mxu0 0.0
          %753 = vmatpush.xpose.msra.mxu0 0.0
          %754 = vmatpush.xpose.msra.mxu0 0.0
          %755 = vmatpush.xpose.msra.mxu0 0.0
          %756 = vmatpush.xpose.msra.mxu0 0.0
          %757 = vmatpush.xpose.msra.mxu0 0.0
          %v758 = vand.u32 %v741, 4294901760
          %759 = vmatpush.xpose.msra.mxu0 %v758
          %v760 = vand.u32 %v381, 4294901760
          %v761 = vsub.f32 %v381, %v760
          %v762 = vand.u32 %v761, 4294901760
          %v763 = vsub.f32 %v761, %v762
          %v764 = vand.u32 %v763, 4294901760
          %765 = vmatmul.f32.gmra.mxu0 %v764
          %v766 = vpop.f32.mrf.mxu0
          %v767 = vadd.f32 0.0, %v766
          %768 = vdwg.mxu0
          %769 = vmatpush.xpose.msra.mxu0 0.0
          %770 = vmatpush.xpose.msra.mxu0 0.0
          %771 = vmatpush.xpose.msra.mxu0 0.0
          %772 = vmatpush.xpose.msra.mxu0 0.0
          %773 = vmatpush.xpose.msra.mxu0 0.0
          %774 = vmatpush.xpose.msra.mxu0 0.0
          %775 = vmatpush.xpose.msra.mxu0 0.0
          %776 = vmatpush.xpose.msra.mxu0 0.0
          %777 = vmatpush.xpose.msra.mxu0 0.0
          %778 = vmatpush.xpose.msra.mxu0 0.0
          %779 = vmatpush.xpose.msra.mxu0 0.0
          %780 = vmatpush.xpose.msra.mxu0 0.0
          %781 = vmatpush.xpose.msra.mxu0 0.0
          %782 = vmatpush.xpose.msra.mxu0 0.0
          %783 = vmatpush.xpose.msra.mxu0 0.0
          %v784 = vand.u32 %v741, 4294901760
          %v785 = vsub.f32 %v741, %v784
          %v786 = vand.u32 %v785, 4294901760
          %v787 = vsub.f32 %v785, %v786
          %v788 = vand.u32 %v787, 4294901760
          %789 = vmatpush.xpose.msra.mxu0 %v788
          %v790 = vand.u32 %v381, 4294901760
          %791 = vmatmul.f32.gmra.mxu0 %v790
          %v792 = vpop.f32.mrf.mxu0
          %v793 = vadd.f32 %v767, %v792
          %794 = vdwg.mxu0
          %795 = vmatpush.xpose.msra.mxu0 0.0
          %796 = vmatpush.xpose.msra.mxu0 0.0
          %797 = vmatpush.xpose.msra.mxu0 0.0
          %798 = vmatpush.xpose.msra.mxu0 0.0
          %799 = vmatpush.xpose.msra.mxu0 0.0
          %800 = vmatpush.xpose.msra.mxu0 0.0
          %801 = vmatpush.xpose.msra.mxu0 0.0
          %802 = vmatpush.xpose.msra.mxu0 0.0
          %803 = vmatpush.xpose.msra.mxu0 0.0
          %804 = vmatpush.xpose.msra.mxu0 0.0
          %805 = vmatpush.xpose.msra.mxu0 0.0
          %806 = vmatpush.xpose.msra.mxu0 0.0
          %807 = vmatpush.xpose.msra.mxu0 0.0
          %808 = vmatpush.xpose.msra.mxu0 0.0
          %809 = vmatpush.xpose.msra.mxu0 0.0
          %v810 = vand.u32 %v741, 4294901760
          %v811 = vsub.f32 %v741, %v810
          %812 = vmatpush.xpose.msra.mxu0 %v811
          %v813 = vand.u32 %v381, 4294901760
          %v814 = vsub.f32 %v381, %v813
          %815 = vmatmul.f32.gmra.mxu0 %v814
          %v816 = vpop.f32.mrf.mxu0
          %v817 = vadd.f32 %v793, %v816
          %818 = vdwg.mxu0
          %819 = vmatpush.xpose.msra.mxu0 0.0
          %820 = vmatpush.xpose.msra.mxu0 0.0
          %821 = vmatpush.xpose.msra.mxu0 0.0
          %822 = vmatpush.xpose.msra.mxu0 0.0
          %823 = vmatpush.xpose.msra.mxu0 0.0
          %824 = vmatpush.xpose.msra.mxu0 0.0
          %825 = vmatpush.xpose.msra.mxu0 0.0
          %826 = vmatpush.xpose.msra.mxu0 0.0
          %827 = vmatpush.xpose.msra.mxu0 0.0
          %828 = vmatpush.xpose.msra.mxu0 0.0
          %829 = vmatpush.xpose.msra.mxu0 0.0
          %830 = vmatpush.xpose.msra.mxu0 0.0
          %831 = vmatpush.xpose.msra.mxu0 0.0
          %832 = vmatpush.xpose.msra.mxu0 0.0
          %833 = vmatpush.xpose.msra.mxu0 0.0
          %v834 = vand.u32 %v741, 4294901760
          %835 = vmatpush.xpose.msra.mxu0 %v834
          %v836 = vand.u32 %v381, 4294901760
          %v837 = vsub.f32 %v381, %v836
          %v838 = vand.u32 %v837, 4294901760
          %839 = vmatmul.f32.gmra.mxu0 %v838
          %v840 = vpop.f32.mrf.mxu0
          %v841 = vadd.f32 %v817, %v840
          %842 = vdwg.mxu0
          %843 = vmatpush.xpose.msra.mxu0 0.0
          %844 = vmatpush.xpose.msra.mxu0 0.0
          %845 = vmatpush.xpose.msra.mxu0 0.0
          %846 = vmatpush.xpose.msra.mxu0 0.0
          %847 = vmatpush.xpose.msra.mxu0 0.0
          %848 = vmatpush.xpose.msra.mxu0 0.0
          %849 = vmatpush.xpose.msra.mxu0 0.0
          %850 = vmatpush.xpose.msra.mxu0 0.0
          %851 = vmatpush.xpose.msra.mxu0 0.0
          %852 = vmatpush.xpose.msra.mxu0 0.0
          %853 = vmatpush.xpose.msra.mxu0 0.0
          %854 = vmatpush.xpose.msra.mxu0 0.0
          %855 = vmatpush.xpose.msra.mxu0 0.0
          %856 = vmatpush.xpose.msra.mxu0 0.0
          %857 = vmatpush.xpose.msra.mxu0 0.0
          %v858 = vand.u32 %v741, 4294901760
          %v859 = vsub.f32 %v741, %v858
          %v860 = vand.u32 %v859, 4294901760
          %861 = vmatpush.xpose.msra.mxu0 %v860
          %v862 = vand.u32 %v381, 4294901760
          %863 = vmatmul.f32.gmra.mxu0 %v862
          %v864 = vpop.f32.mrf.mxu0
          %v865 = vadd.f32 %v841, %v864
          %866 = vdwg.mxu0
          %867 = vmatpush.xpose.msra.mxu0 0.0
          %868 = vmatpush.xpose.msra.mxu0 0.0
          %869 = vmatpush.xpose.msra.mxu0 0.0
          %870 = vmatpush.xpose.msra.mxu0 0.0
          %871 = vmatpush.xpose.msra.mxu0 0.0
          %872 = vmatpush.xpose.msra.mxu0 0.0
          %873 = vmatpush.xpose.msra.mxu0 0.0
          %874 = vmatpush.xpose.msra.mxu0 0.0
          %875 = vmatpush.xpose.msra.mxu0 0.0
          %876 = vmatpush.xpose.msra.mxu0 0.0
          %877 = vmatpush.xpose.msra.mxu0 0.0
          %878 = vmatpush.xpose.msra.mxu0 0.0
          %879 = vmatpush.xpose.msra.mxu0 0.0
          %880 = vmatpush.xpose.msra.mxu0 0.0
          %881 = vmatpush.xpose.msra.mxu0 0.0
          %v882 = vand.u32 %v741, 4294901760
          %883 = vmatpush.xpose.msra.mxu0 %v882
          %v884 = vand.u32 %v381, 4294901760
          %885 = vmatmul.f32.gmra.mxu0 %v884
          %v886 = vpop.f32.mrf.mxu0
          %v887 = vadd.f32 %v865, %v886
          %888 = vdwg.mxu0
          %v889 = vsub.f32 %v887, %v530
          %s890 = smul.u32 %s711, 4
          %s891 = scalar_lea.vmem %s291, %s890
          %892 = vst.msk [vmem:[%s891] sm:$0x7] %vm678, %v889
          %s893 = scalar_lea.vmem %s296, %s890
          %894 = vst.msk [vmem:[%s893 - $0x3] sm:$0x38] %vm680, %v887
          %v895 = vadd.f32 %v887, 0.5
          %v896 = vcvt.f32.s32.to.zero.pseudo %v895
          %s897 = scalar_lea.vmem %s300, %s711
          %898 = vst.msk [vmem:[%s897 - $0x6] sm:$0x40] %vm684, %v896
          %v899 = vsel %vm737, inf, %v716
        $region36: #{group_forward.1} parent=23 // loop_footer
          %s715 = sadd.s32 1, %s711
        $region37: #{group_forward.1} parent=23 // loop_footer_branch
          %710 = sbr.rel target = $region33
        $region38: #{group_forward.1} parent=23 // loop_exit
          _
        %s900 = sand.u32 %s55, 1
        %s901 = scalar_lea.sflag [#allocation3], %s900
        %s902 = sand.u32 %s55, 1
        %s903 = scalar_lea.vmem [#allocation2], %s902
        %p904 = scmp.lt.s32.totalorder %s21, 1
        %s905 = scalar_select %p904, %s21, 1
        %s906 = smul.addr %s905, 4
        %s907 = scalar_lea.vmem %s2, %s906
        %p908 = scmp.lt.s32.totalorder %s21, 1
        %s909 = scalar_select %p908, %s21, 1
        %s910 = smul.addr %s909, 4
        %s911 = scalar_lea.vmem %s3, %s910
        %p912 = scmp.lt.s32.totalorder %s21, 1
        %s913 = scalar_select %p912, %s21, 1
        %s914 = smul.addr %s913, 8
        %s915 = smul.addr %s914, 4
        %s916 = scalar_lea.vmem %s4, %s915
        %p917 = scmp.lt.s32.totalorder %s21, 1
        %s918 = scalar_select %p917, %s21, 1
        %s919 = smul.addr %s918, 8
        %s920 = smul.addr %s919, 4
        %s921 = scalar_lea.vmem %s5, %s920
        %p922 = scmp.lt.s32.totalorder %s21, 1
        %s923 = scalar_select %p922, %s21, 1
        %s924 = smul.addr %s923, 8
        %s925 = scalar_lea.vmem %s6, %s924
        // Predicated region
        $region39: #{group_forward.1} parent=23 // pred_check
          %p926 = pneg %p65
        $region40: #{group_forward.1} parent=23 // pred_check_branch
          %928 = sbr.rel (%p926) target = $region42
        $region41: #{group_forward.1} parent=23 // pred_region
          %930 = vsyncadd %s901, 0
          %s931 = scalar_lea.hbm %s1, %s21
          %s933 = sshll.u32 %s903, 4
          %s934 = int_to_ptr.vmem [resolvable:$true] %s933
          %s935 = sshll.u32 %s931, 4
          %s936 = int_to_ptr.hbm [resolvable:$true] %s935
          %938 = dma.vmem_to_hbm [thread:$0]  %s934, 16, %s936, %s901
        $region42: #{group_forward.1} parent=23 // pred_fallthru
          _
        // Predicated region
        $region43: #{group_forward.1} parent=23 // pred_check
          %p939 = pneg %p91
        $region44: #{group_forward.1} parent=23 // pred_check_branch
          %941 = sbr.rel (%p939) target = $region46
        $region45: #{group_forward.1} parent=23 // pred_region
          _
        $region46: #{group_forward.1} parent=23 // pred_fallthru
          _
        // Predicated region
        $region47: #{group_forward.1} parent=23 // pred_check
          %p942 = pneg %p117
        $region48: #{group_forward.1} parent=23 // pred_check_branch
          %944 = sbr.rel (%p942) target = $region50
        $region49: #{group_forward.1} parent=23 // pred_region
          _
        $region50: #{group_forward.1} parent=23 // pred_fallthru
          _
        // Predicated region
        $region51: #{group_forward.1} parent=23 // pred_check
          %p945 = pneg %p143
        $region52: #{group_forward.1} parent=23 // pred_check_branch
          %947 = sbr.rel (%p945) target = $region54
        $region53: #{group_forward.1} parent=23 // pred_region
          _
        $region54: #{group_forward.1} parent=23 // pred_fallthru
          _
        // Predicated region
        $region55: #{group_forward.1} parent=23 // pred_check
          %p948 = pneg %p169
        $region56: #{group_forward.1} parent=23 // pred_check_branch
          %950 = sbr.rel (%p948) target = $region58
        $region57: #{group_forward.1} parent=23 // pred_region
          _
        $region58: #{group_forward.1} parent=23 // pred_fallthru
          _
        // Predicated region
        $region59: #{group_forward.1} parent=23 // pred_check
          %p951 = pneg %p195
        $region60: #{group_forward.1} parent=23 // pred_check_branch
          %953 = sbr.rel (%p951) target = $region62
        $region61: #{group_forward.1} parent=23 // pred_region
          _
        $region62: #{group_forward.1} parent=23 // pred_fallthru
          _
      $region24: #{group_forward.1} parent=5 // pred_fallthru
        _
      %p954 = scmp.le.s32.totalorder 2, %s16
      // Predicated region
      $region63: #{group_forward.1} parent=5 // pred_check
        %p955 = pneg %p954
      $region64: #{group_forward.1} parent=5 // pred_check_branch
        %957 = sbr.rel (%p955) target = $region66
      $region65: #{group_forward.1} parent=5 // pred_region
        %s958 = ssub.s32 %s16, 2
        // Predicated region
        $region67: #{group_forward.1} parent=65 // pred_check
          %p959 = pneg %p71
        $region68: #{group_forward.1} parent=65 // pred_check_branch
          %961 = sbr.rel (%p959) target = $region70
        $region69: #{group_forward.1} parent=65 // pred_region
          %s962 = sand.u32 %s56, 1
          %s963 = scalar_lea.sflag [#allocation3], %s962
          %s964 = sand.u32 %s56, 1
          %s965 = scalar_lea.vmem [#allocation2], %s964
          %967 = dma.done %s963, 16
        $region70: #{group_forward.1} parent=65 // pred_fallthru
          _
        // Predicated region
        $region71: #{group_forward.1} parent=65 // pred_check
          %p968 = pneg %p97
        $region72: #{group_forward.1} parent=65 // pred_check_branch
          %970 = sbr.rel (%p968) target = $region74
        $region73: #{group_forward.1} parent=65 // pred_region
          %p971 = scmp.lt.s32.totalorder %s22, 1
          %s972 = scalar_select %p971, %s22, 1
          %s973 = smul.addr %s972, 4
          %s974 = scalar_lea.vmem %s2, %s973
        $region74: #{group_forward.1} parent=65 // pred_fallthru
          _
        // Predicated region
        $region75: #{group_forward.1} parent=65 // pred_check
          %p975 = pneg %p123
        $region76: #{group_forward.1} parent=65 // pred_check_branch
          %977 = sbr.rel (%p975) target = $region78
        $region77: #{group_forward.1} parent=65 // pred_region
          %p978 = scmp.lt.s32.totalorder %s22, 1
          %s979 = scalar_select %p978, %s22, 1
          %s980 = smul.addr %s979, 4
          %s981 = scalar_lea.vmem %s3, %s980
        $region78: #{group_forward.1} parent=65 // pred_fallthru
          _
        // Predicated region
        $region79: #{group_forward.1} parent=65 // pred_check
          %p982 = pneg %p149
        $region80: #{group_forward.1} parent=65 // pred_check_branch
          %984 = sbr.rel (%p982) target = $region82
        $region81: #{group_forward.1} parent=65 // pred_region
          %p985 = scmp.lt.s32.totalorder %s22, 1
          %s986 = scalar_select %p985, %s22, 1
          %s987 = smul.addr %s986, 8
          %s988 = smul.addr %s987, 4
          %s989 = scalar_lea.vmem %s4, %s988
        $region82: #{group_forward.1} parent=65 // pred_fallthru
          _
        // Predicated region
        $region83: #{group_forward.1} parent=65 // pred_check
          %p990 = pneg %p175
        $region84: #{group_forward.1} parent=65 // pred_check_branch
          %992 = sbr.rel (%p990) target = $region86
        $region85: #{group_forward.1} parent=65 // pred_region
          %p993 = scmp.lt.s32.totalorder %s22, 1
          %s994 = scalar_select %p993, %s22, 1
          %s995 = smul.addr %s994, 8
          %s996 = smul.addr %s995, 4
          %s997 = scalar_lea.vmem %s5, %s996
        $region86: #{group_forward.1} parent=65 // pred_fallthru
          _
        // Predicated region
        $region87: #{group_forward.1} parent=65 // pred_check
          %p998 = pneg %p201
        $region88: #{group_forward.1} parent=65 // pred_check_branch
          %1000 = sbr.rel (%p998) target = $region90
        $region89: #{group_forward.1} parent=65 // pred_region
          %p1001 = scmp.lt.s32.totalorder %s22, 1
          %s1002 = scalar_select %p1001, %s22, 1
          %s1003 = smul.addr %s1002, 8
          %s1004 = scalar_lea.vmem %s6, %s1003
        $region90: #{group_forward.1} parent=65 // pred_fallthru
          _
      $region66: #{group_forward.1} parent=5 // pred_fallthru
        _
    $region6: #{group_forward.1} parent=1 // loop_footer
      %s20 = sadd.s32 1, %s16
    $region7: #{group_forward.1} parent=1 // loop_footer_branch
      %15 = sbr.rel target = $region3
    $region8: #{group_forward.1} parent=1 // loop_exit
      _
    %1005 = vsyncpa [#allocation3], 1
    %s1006 = scalar_lea.sflag [#allocation3], 1
    %1007 = vsyncpa %s1006, 1

</llo_original>
